<compile_context>
chip_gen: v5e
topology: v5e:2x2
jax: 0.10.0
libtpu: 0.0.40
codegen_flags: <defaults>
</compile_context>

<pallas_src>
import functools

import jax
import jax.numpy as jnp
from jax.experimental import pallas as pl
from jax.experimental.pallas import tpu as pltpu


# ----------------------------------------------------------------------------
# Pallas kernel: tiled matmul + bias epilogue (the wrapped net's forward)
# ----------------------------------------------------------------------------
def _linear_kernel(x_ref, w_ref, b_ref, o_ref, acc_ref):
    k = pl.program_id(2)

    @pl.when(k == 0)
    def _init():
        acc_ref[...] = jnp.zeros_like(acc_ref)

    acc_ref[...] += jnp.dot(
        x_ref[...], w_ref[...], preferred_element_type=jnp.float32
    )

    @pl.when(k == pl.num_programs(2) - 1)
    def _finalize():
        # Bias add only once, in the finalize phase, in f32.
        o_ref[...] = (acc_ref[...] + b_ref[...].astype(jnp.float32)).astype(
            o_ref.dtype
        )


def _fit_tile(dim, preferred):
    """Use the preferred (128/256-aligned) tile if it divides the dim,
    otherwise fall back to a full-dim block (always layout-legal)."""
    t = min(preferred, dim)
    if dim % t != 0:
        t = dim
    return t


@functools.partial(
    jax.jit, static_argnames=("tm", "tn", "tk", "mxu_dtype")
)
def pallas_linear(x, w, b, *, tm=128, tn=256, tk=256, mxu_dtype=None):
    """y = x @ w + b via a tiled Pallas TPU kernel.

    mxu_dtype: optional dtype (e.g. jnp.bfloat16) to cast the MXU operands to;
    accumulation and the bias epilogue remain f32, output keeps x.dtype.
    """
    m, kdim = x.shape
    kdim_w, n = w.shape
    assert kdim == kdim_w, (kdim, kdim_w)
    out_dtype = x.dtype

    tm = _fit_tile(m, tm)
    tn = _fit_tile(n, tn)
    tk = _fit_tile(kdim, tk)

    b2 = b.reshape(1, n)
    x_op = x if mxu_dtype is None else x.astype(mxu_dtype)
    w_op = w if mxu_dtype is None else w.astype(mxu_dtype)

    grid = (m // tm, n // tn, kdim // tk)

    bytes_accessed = (
        x_op.size * x_op.dtype.itemsize
        + w_op.size * w_op.dtype.itemsize
        + b2.size * b2.dtype.itemsize
        + m * n * jnp.dtype(out_dtype).itemsize
    )

    return pl.pallas_call(
        _linear_kernel,
        out_shape=jax.ShapeDtypeStruct((m, n), out_dtype),
        grid_spec=pltpu.PrefetchScalarGridSpec(
            num_scalar_prefetch=0,
            grid=grid,
            in_specs=[
                pl.BlockSpec((tm, tk), lambda i, j, k: (i, k)),
                pl.BlockSpec((tk, tn), lambda i, j, k: (k, j)),
                pl.BlockSpec((1, tn), lambda i, j, k: (0, j)),
            ],
            out_specs=pl.BlockSpec((tm, tn), lambda i, j, k: (i, j)),
            scratch_shapes=[pltpu.VMEM((tm, tn), jnp.float32)],
        ),
        compiler_params=pltpu.CompilerParams(
            dimension_semantics=("parallel", "parallel", "arbitrary"),
            vmem_limit_bytes=48 * 1024 * 1024,  # safe on v5e/v6e/v7x
        ),
        cost_estimate=pl.CostEstimate(
            flops=2 * m * n * kdim,
            transcendentals=0,
            bytes_accessed=bytes_accessed,
        ),
    )(x_op, w_op, b2)


# ----------------------------------------------------------------------------
# Wrap: exact semantics of the PyTorch module
# ----------------------------------------------------------------------------
class Wrap:
    """JAX equivalent of mlmisc.args_sequential.Wrap.

    forward(*args, **kwargs) calls the wrapped net, caches the result in
    `self.res`, and returns it.
    """

    def __init__(self, net):
        self.net = net
        self.res = None

    def __call__(self, *args, **kwargs):
        return self.forward(*args, **kwargs)

    def forward(self, *args, **kwargs):
        self.res = self.net(*args, **kwargs)
        return self.res


class PallasLinearNet:
    """Example inner net wrapped by Wrap: a Linear layer whose matmul runs in
    the tiled Pallas kernel above (call path is jitted)."""

    def __init__(self, d_in, d_out, key, mxu_dtype=None):
        kw, kb = jax.random.split(key)
        self.w = (
            jax.random.normal(kw, (d_in, d_out), jnp.float32)
            / jnp.sqrt(jnp.float32(d_in))
        )
        self.b = jax.random.normal(kb, (d_out,), jnp.float32) * 0.01
        self.mxu_dtype = mxu_dtype

    def __call__(self, x):
        return pallas_linear(x, self.w, self.b, mxu_dtype=self.mxu_dtype)


if __name__ == "__main__":
    key = jax.random.PRNGKey(0)
    k_x, k_net = jax.random.split(key)

    # Small but lane-dense / MXU-aligned demo shapes: grid = (2, 2, 2).
    seq, d_in, d_out = 256, 512, 512
    x = jax.random.normal(k_x, (seq, d_in), jnp.float32)

    net = PallasLinearNet(d_in, d_out, k_net)
    wrap = Wrap(net)

    out = wrap(x)
    jax.block_until_ready(out)

    # Wrap semantics checks: result is cached and identical to the return value.
    assert wrap.res is out
    assert out.shape == (seq, d_out)

    # Numerical sanity vs. plain JAX reference (f32 MXU path).
    ref = x @ net.w + net.b
    assert jnp.allclose(out, ref, atol=2e-2, rtol=2e-2)

    # bf16-operand MXU path (fast path on v6e/v7x), f32 accumulate + epilogue.
    out_bf16 = pallas_linear(x, net.w, net.b, mxu_dtype=jnp.bfloat16)
    jax.block_until_ready(out_bf16)
    assert out_bf16.dtype == jnp.float32
    assert jnp.allclose(out_bf16, ref, atol=1e-1, rtol=5e-2)

    print("KERNEL_OK")
</pallas_src>

<mosaic_0001>
module attributes {stable_mosaic.version = 11 : i64} {
  func.func @_linear_kernel(%arg0: i32, %arg1: i32, %arg2: i32, %arg3: memref<128x256xf32, #tpu.memory_space<vmem>>, %arg4: memref<256x256xf32, #tpu.memory_space<vmem>>, %arg5: memref<1x256xf32, #tpu.memory_space<vmem>>, %arg6: memref<128x256xf32, #tpu.memory_space<vmem>>, %arg7: memref<128x256xf32, #tpu.memory_space<vmem>>) attributes {dimension_semantics = [#tpu.dimension_semantics<parallel>, #tpu.dimension_semantics<parallel>, #tpu.dimension_semantics<arbitrary>], iteration_bounds = array<i64: 2, 2, 2>, scalar_prefetch = 0 : i64, scratch_operands = 1 : i64, tpu.core_type = #tpu.core_type<tc>, window_params = [{transform_indices = @transform_0, window_bounds = array<i64: 128, 256>}, {transform_indices = @transform_1, window_bounds = array<i64: 256, 256>}, {transform_indices = @transform_2, window_bounds = array<i64: 1, 256>}, {transform_indices = @transform_3, window_bounds = array<i64: 128, 256>}]} {
    %c0_i32 = arith.constant 0 : i32
    %0 = arith.cmpi eq, %arg2, %c0_i32 : i32
    %1 = arith.extui %0 : i1 to i32
    %c0_i32_0 = arith.constant 0 : i32
    %2 = arith.cmpi ne, %1, %c0_i32_0 : i32
    scf.if %2 {
      %cst_9 = arith.constant 0.000000e+00 : f32
      %12 = vector.broadcast %cst_9 : f32 to vector<128x256xf32>
      %c0_10 = arith.constant 0 : index
      %c0_11 = arith.constant 0 : index
      %13 = vector.load %arg7[%c0_10, %c0_11] : memref<128x256xf32, #tpu.memory_space<vmem>>, vector<128x256xf32>
      tpu.vector_store %arg7[%c0_10, %c0_11], %12 {strides = array<i32>} : memref<128x256xf32, #tpu.memory_space<vmem>>, vector<128x256xf32>,
    } else {
    }
    %c0 = arith.constant 0 : index
    %c0_1 = arith.constant 0 : index
    %3 = vector.load %arg7[%c0, %c0_1] : memref<128x256xf32, #tpu.memory_space<vmem>>, vector<128x256xf32>
    %c0_2 = arith.constant 0 : index
    %c0_3 = arith.constant 0 : index
    %4 = vector.load %arg3[%c0_2, %c0_3] : memref<128x256xf32, #tpu.memory_space<vmem>>, vector<128x256xf32>
    %c0_4 = arith.constant 0 : index
    %c0_5 = arith.constant 0 : index
    %5 = vector.load %arg4[%c0_4, %c0_5] : memref<256x256xf32, #tpu.memory_space<vmem>>, vector<256x256xf32>
    %cst = arith.constant dense<0.000000e+00> : vector<128x256xf32>
    %6 = tpu.matmul %4, %5, %cst {dimension_numbers = #tpu.dot_dimension_numbers<[1], [0], [0], [1], [0, 0, 1, 1], [], []>} : vector<128x256xf32>, vector<256x256xf32>, vector<128x256xf32> -> vector<128x256xf32>
    %7 = arith.addf %3, %6 : vector<128x256xf32>
    %c0_6 = arith.constant 0 : index
    %c0_7 = arith.constant 0 : index
    %8 = vector.load %arg7[%c0_6, %c0_7] : memref<128x256xf32, #tpu.memory_space<vmem>>, vector<128x256xf32>
    tpu.vector_store %arg7[%c0_6, %c0_7], %7 {strides = array<i32>} : memref<128x256xf32, #tpu.memory_space<vmem>>, vector<128x256xf32>,
    %c1_i32 = arith.constant 1 : i32
    %9 = arith.cmpi eq, %arg2, %c1_i32 : i32
    %10 = arith.extui %9 : i1 to i32
    %c0_i32_8 = arith.constant 0 : i32
    %11 = arith.cmpi ne, %10, %c0_i32_8 : i32
    scf.if %11 {
      %c0_9 = arith.constant 0 : index
      %c0_10 = arith.constant 0 : index
      %12 = vector.load %arg7[%c0_9, %c0_10] : memref<128x256xf32, #tpu.memory_space<vmem>>, vector<128x256xf32>
      %c0_11 = arith.constant 0 : index
      %c0_12 = arith.constant 0 : index
      %13 = vector.load %arg5[%c0_11, %c0_12] : memref<1x256xf32, #tpu.memory_space<vmem>>, vector<1x256xf32>
      %14 = vector.broadcast %13 : vector<1x256xf32> to vector<128x256xf32>
      %15 = arith.addf %12, %14 : vector<128x256xf32>
      %c0_13 = arith.constant 0 : index
      %c0_14 = arith.constant 0 : index
      %16 = vector.load %arg6[%c0_13, %c0_14] : memref<128x256xf32, #tpu.memory_space<vmem>>, vector<128x256xf32>
      tpu.vector_store %arg6[%c0_13, %c0_14], %15 {strides = array<i32>} : memref<128x256xf32, #tpu.memory_space<vmem>>, vector<128x256xf32>,
    } else {
    }
    return
  }
  func.func @transform_0(%arg0: i32, %arg1: i32, %arg2: i32) -> (i32, i32) {
    %c0_i32 = arith.constant 0 : i32
    return %arg0, %arg2 : i32, i32
  }
  func.func @transform_1(%arg0: i32, %arg1: i32, %arg2: i32) -> (i32, i32) {
    %c0_i32 = arith.constant 0 : i32
    return %arg2, %arg1 : i32, i32
  }
  func.func @transform_2(%arg0: i32, %arg1: i32, %arg2: i32) -> (i32, i32) {
    %c0_i32 = arith.constant 0 : i32
    %c0_i32_0 = arith.constant 0 : i32
    return %c0_i32, %arg1 : i32, i32
  }
  func.func @transform_3(%arg0: i32, %arg1: i32, %arg2: i32) -> (i32, i32) {
    %c0_i32 = arith.constant 0 : i32
    return %arg0, %arg1 : i32, i32
  }
}

</mosaic_0001>

<llo_original>
// kernel: pallas_linear.1
$region0: #{pallas_linear.1}
  #allocation0 [shape = 'u32[]', space=smem, size = 0x4, offset = 0x4, fixed_abs, tag = 'smem constant byte address 0x4 - core index']
  #allocation1 [shape = 'u32[72,128]{1,0:T(1,128)}', space=vmem, size = 0x9000, scoped, tag = 'internal scratch']
  #allocation2 [shape = 'f32[128,256]{1,0:T(8,128)}', space=vmem, size = 0x20000, scoped, tag = 'scratch operand']
  %s0 = inlined_call_operand.hbm [shape: f32[256,512], index: 0, kind: input, shape index: {}]
  %s1 = inlined_call_operand.hbm [shape: f32[512,512], index: 1, kind: input, shape index: {}]
  %s2 = inlined_call_operand.hbm [shape: f32[1,512], index: 2, kind: input, shape index: {}]
  %s3 = inlined_call_operand.hbm [shape: f32[256,512], index: 3, kind: output, shape index: {}]
  %s4 = sld [smem:[#allocation0]]
  $region65: #{pallas_linear.1} parent=0
    _
  %s6 = ssub.s32 1, %s4
  %s7 = scalar_select 0, %s6, %s4
  $region1: #{pallas_linear.1} parent=0
    #allocation3 [shape = 'u8[262144]{0}', space=vmem, size = 0x40000, scoped, tag = 'input window, operand 0']
    #allocation4 [shape = 's32[2]{0}', space=sflag, size = 0x8, scoped, tag = 'scoped memory for pallas_linear.1']
    #allocation5 [shape = 's32[2]{0}', space=sflag, size = 0x8, scoped, tag = 'scoped memory for pallas_linear.1']
    #allocation6 [shape = 'u8[524288]{0}', space=vmem, size = 0x80000, scoped, tag = 'input window, operand 1']
    #allocation7 [shape = 's32[2]{0}', space=sflag, size = 0x8, scoped, tag = 'scoped memory for pallas_linear.1']
    #allocation8 [shape = 'u8[2048]{0}', space=vmem, size = 0x800, scoped, tag = 'input window, operand 2']
    #allocation9 [shape = 'u8[262144]{0}', space=vmem, size = 0x40000, scoped, tag = 'output window, operand 0']
    %8 = vsyncpa [#allocation4], 0
    %s9 = scalar_lea.sflag [#allocation4], 1
    %10 = vsyncpa %s9, 0
    %11 = vsyncpa [#allocation7], 0
    %s12 = scalar_lea.sflag [#allocation7], 1
    %13 = vsyncpa %s12, 0
    %14 = vsyncpa [#allocation5], 0
    %s15 = scalar_lea.sflag [#allocation5], 1
    %16 = vsyncpa %s15, 0
    loop: start=0, step=1, limit=10
    $region2: #{pallas_linear.1} parent=1 // loop_pre_header
      _
    $region3: #{pallas_linear.1} parent=1 // loop_header
      %s18 = sphi 0, %s22
      %p19 = scmp.ge.s32.totalorder %s18, 10
      %s25 = sphi 0, %s44
      %s26 = sphi 0, %s40
      %s27 = sphi 0, %s36
      %s28 = sphi 0, %s25
      %s29 = sphi 0, %s26
      %s30 = sphi 0, %s27
      %s31 = sphi 0, %s28
      %s32 = sphi 0, %s29
      %s33 = sphi 0, %s30
      %s49 = sphi 0, %s51
      %s52 = sphi 0, %s49
      %s53 = sphi 0, %s52
      %s69 = sphi 0, %s53
      %s77 = sphi 0, %s79
      %s80 = sphi 0, %s77
      %s81 = sphi 0, %s80
      %s97 = sphi 0, %s81
      %s103 = sphi 0, %s105
      %s106 = sphi 0, %s103
      %s107 = sphi 0, %s106
      %s123 = sphi 0, %s107
      %s131 = sphi 0, %s133
      %s134 = sphi 0, %s131
      %s135 = sphi 0, %s134
      %s151 = sphi 0, %s135
    $region4: #{pallas_linear.1} parent=1 // loop_header_branch
      %21 = sbr.rel (%p19) target = $region8
    $region5: #{pallas_linear.1} parent=1 // loop_body
      %s23 = ssub.s32 %s18, 1
      %s24 = ssub.s32 %s18, 2
      %s34 = sadd.s32 1, %s27
      %p35 = scmp.ge.s32.totalorder %s34, 2
      %s36 = scalar_select %p35, 0, %s34
      %s37 = sadd.s32 1, %s26
      %s38 = scalar_select %p35, %s37, %s26
      %p39 = scmp.ge.s32.totalorder %s38, 2
      %s40 = scalar_select %p39, 0, %s38
      %s41 = sadd.s32 1, %s25
      %s42 = scalar_select %p39, %s41, %s25
      %p43 = scmp.ge.s32.totalorder %s42, 2
      %s44 = scalar_select %p43, 0, %s42
      %s45 = ssub.s32 %s25, %s44
      %s46 = ssub.s32 %s27, %s36
      %s47 = sor.u32 %s45, %s46
      %p48 = scmp.eq.s32.totalorder %s47, 0
      %s50 = sadd.s32 %s49, 1
      %s51 = scalar_select %p48, %s49, %s50
      %p54 = pneg %p48
      %p55 = scmp.eq.s32.totalorder %s18, 7
      %p56 = por %p54, %p55
      %p57 = scmp.ne.s32.totalorder %s49, %s52
      %p58 = scmp.eq.s32.totalorder %s18, 0
      %p59 = por %p57, %p58
      %p60 = scmp.ne.s32.totalorder %s49, %s52
      %p61 = scmp.eq.s32.totalorder %s23, 7
      %p62 = por %p60, %p61
      %p63 = scmp.ne.s32.totalorder %s52, %s53
      %p64 = scmp.eq.s32.totalorder %s23, 0
      %p65 = por %p63, %p64
      %p66 = scmp.ne.s32.totalorder %s52, %s53
      %p67 = scmp.eq.s32.totalorder %s24, 7
      %p68 = por %p66, %p67
      %p70 = scmp.ne.s32.totalorder %s53, %s69
      %p71 = scmp.eq.s32.totalorder %s24, 0
      %p72 = por %p70, %p71
      %s73 = ssub.s32 %s27, %s36
      %s74 = ssub.s32 %s26, %s40
      %s75 = sor.u32 %s73, %s74
      %p76 = scmp.eq.s32.totalorder %s75, 0
      %s78 = sadd.s32 %s77, 1
      %s79 = scalar_select %p76, %s77, %s78
      %p82 = pneg %p76
      %p83 = scmp.eq.s32.totalorder %s18, 7
      %p84 = por %p82, %p83
      %p85 = scmp.ne.s32.totalorder %s77, %s80
      %p86 = scmp.eq.s32.totalorder %s18, 0
      %p87 = por %p85, %p86
      %p88 = scmp.ne.s32.totalorder %s77, %s80
      %p89 = scmp.eq.s32.totalorder %s23, 7
      %p90 = por %p88, %p89
      %p91 = scmp.ne.s32.totalorder %s80, %s81
      %p92 = scmp.eq.s32.totalorder %s23, 0
      %p93 = por %p91, %p92
      %p94 = scmp.ne.s32.totalorder %s80, %s81
      %p95 = scmp.eq.s32.totalorder %s24, 7
      %p96 = por %p94, %p95
      %p98 = scmp.ne.s32.totalorder %s81, %s97
      %p99 = scmp.eq.s32.totalorder %s24, 0
      %p100 = por %p98, %p99
      %s101 = ssub.s32 %s26, %s40
      %p102 = scmp.eq.s32.totalorder %s101, 0
      %s104 = sadd.s32 %s103, 1
      %s105 = scalar_select %p102, %s103, %s104
      %p108 = pneg %p102
      %p109 = scmp.eq.s32.totalorder %s18, 7
      %p110 = por %p108, %p109
      %p111 = scmp.ne.s32.totalorder %s103, %s106
      %p112 = scmp.eq.s32.totalorder %s18, 0
      %p113 = por %p111, %p112
      %p114 = scmp.ne.s32.totalorder %s103, %s106
      %p115 = scmp.eq.s32.totalorder %s23, 7
      %p116 = por %p114, %p115
      %p117 = scmp.ne.s32.totalorder %s106, %s107
      %p118 = scmp.eq.s32.totalorder %s23, 0
      %p119 = por %p117, %p118
      %p120 = scmp.ne.s32.totalorder %s106, %s107
      %p121 = scmp.eq.s32.totalorder %s24, 7
      %p122 = por %p120, %p121
      %p124 = scmp.ne.s32.totalorder %s107, %s123
      %p125 = scmp.eq.s32.totalorder %s24, 0
      %p126 = por %p124, %p125
      %s127 = ssub.s32 %s25, %s44
      %s128 = ssub.s32 %s26, %s40
      %s129 = sor.u32 %s127, %s128
      %p130 = scmp.eq.s32.totalorder %s129, 0
      %s132 = sadd.s32 %s131, 1
      %s133 = scalar_select %p130, %s131, %s132
      %p136 = pneg %p130
      %p137 = scmp.eq.s32.totalorder %s18, 7
      %p138 = por %p136, %p137
      %p139 = scmp.ne.s32.totalorder %s131, %s134
      %p140 = scmp.eq.s32.totalorder %s18, 0
      %p141 = por %p139, %p140
      %p142 = scmp.ne.s32.totalorder %s131, %s134
      %p143 = scmp.eq.s32.totalorder %s23, 7
      %p144 = por %p142, %p143
      %p145 = scmp.ne.s32.totalorder %s134, %s135
      %p146 = scmp.eq.s32.totalorder %s23, 0
      %p147 = por %p145, %p146
      %p148 = scmp.ne.s32.totalorder %s134, %s135
      %p149 = scmp.eq.s32.totalorder %s24, 7
      %p150 = por %p148, %p149
      %p152 = scmp.ne.s32.totalorder %s135, %s151
      %p153 = scmp.eq.s32.totalorder %s24, 0
      %p154 = por %p152, %p153
      %p155 = scmp.le.s32.totalorder 1, %s18
      %p156 = scmp.lt.s32.totalorder %s18, 9
      %p157 = pnand %p155, %p156
      %p158 = pneg %p157
      // Predicated region
      $region9: #{pallas_linear.1} parent=5 // pred_check
        _
      $region10: #{pallas_linear.1} parent=5 // pred_check_branch
        %160 = sbr.rel (%p157) target = $region12
      $region11: #{pallas_linear.1} parent=5 // pred_region
        %s161 = ssub.s32 %s18, 1
      $region12: #{pallas_linear.1} parent=5 // pred_fallthru
        _
      %p162 = scmp.lt.s32.totalorder %s18, 8
      // Predicated region
      $region13: #{pallas_linear.1} parent=5 // pred_check
        %p163 = pneg %p162
      $region14: #{pallas_linear.1} parent=5 // pred_check_branch
        %165 = sbr.rel (%p163) target = $region16
      $region15: #{pallas_linear.1} parent=5 // pred_region
        // Predicated region
        $region17: #{pallas_linear.1} parent=15 // pred_check
          %p166 = pneg %p59
        $region18: #{pallas_linear.1} parent=15 // pred_check_branch
          %168 = sbr.rel (%p166) target = $region20
        $region19: #{pallas_linear.1} parent=15 // pred_region
          %s169 = sand.u32 %s49, 1
          %s170 = scalar_lea.sflag [#allocation4], %s169
          %s171 = sand.u32 %s49, 1
          %s172 = smul.addr %s171, 256
          %s173 = scalar_lea.vmem [#allocation3], %s172
          %s174 = smul.u32 16, %s25
          %s175 = smul.u32 2, %s27
          %177 = vsyncadd %s170, 0
          %s178 = smul.addr %s174, 4
          %s179 = sadd.s32 %s175, %s178
          %s180 = smul.addr %s179, 8
          %s181 = scalar_lea.hbm %s0, %s180
          %s182 = sshll.u32 %s181, 4
          %s183 = int_to_ptr.hbm [resolvable:$true] %s182
          %s184 = sshll.u32 %s173, 4
          %s185 = int_to_ptr.vmem [resolvable:$true] %s184
          %190 = dma.hbm_to_vmem [thread:$0]  %s183, 4096, %s185, %s170, 512, 256, 16
        $region20: #{pallas_linear.1} parent=15 // pred_fallthru
          _
        // Predicated region
        $region21: #{pallas_linear.1} parent=15 // pred_check
          %p191 = pneg %p87
        $region22: #{pallas_linear.1} parent=15 // pred_check_branch
          %193 = sbr.rel (%p191) target = $region24
        $region23: #{pallas_linear.1} parent=15 // pred_region
          %s194 = sand.u32 %s18, 1
          %s195 = scalar_lea.sflag [#allocation7], %s194
          %s196 = sand.u32 %s77, 1
          %s197 = smul.addr %s196, 512
          %s198 = scalar_lea.vmem [#allocation6], %s197
          %s199 = smul.u32 32, %s27
          %s200 = smul.u32 2, %s26
          %202 = vsyncadd %s195, 0
          %s203 = smul.addr %s199, 4
          %s204 = sadd.s32 %s200, %s203
          %s205 = smul.addr %s204, 8
          %s206 = scalar_lea.hbm %s1, %s205
          %s207 = sshll.u32 %s206, 4
          %s208 = int_to_ptr.hbm [resolvable:$true] %s207
          %s209 = sshll.u32 %s198, 4
          %s210 = int_to_ptr.vmem [resolvable:$true] %s209
          %215 = dma.hbm_to_vmem [thread:$0]  %s208, 8192, %s210, %s195, 512, 256, 16
        $region24: #{pallas_linear.1} parent=15 // pred_fallthru
          _
        // Predicated region
        $region25: #{pallas_linear.1} parent=15 // pred_check
          %p216 = pneg %p113
        $region26: #{pallas_linear.1} parent=15 // pred_check_branch
          %218 = sbr.rel (%p216) target = $region28
        $region27: #{pallas_linear.1} parent=15 // pred_region
          %s219 = sand.u32 %s18, 1
          %s220 = scalar_lea.sflag [#allocation7], %s219
          %s221 = sand.u32 %s103, 1
          %s222 = smul.addr %s221, 2
          %s223 = scalar_lea.vmem [#allocation8], %s222
          %s224 = smul.u32 2, %s26
          %226 = vsyncadd %s220, 0
          %s227 = scalar_lea.hbm %s2, %s224
          %s229 = sshll.u32 %s227, 4
          %s230 = int_to_ptr.hbm [resolvable:$true] %s229
          %s231 = sshll.u32 %s223, 4
          %s232 = int_to_ptr.vmem [resolvable:$true] %s231
          %234 = dma.hbm_to_vmem [thread:$0]  %s230, 32, %s232, %s220
        $region28: #{pallas_linear.1} parent=15 // pred_fallthru
          _
      $region16: #{pallas_linear.1} parent=5 // pred_fallthru
        _
      %p235 = scmp.le.s32.totalorder 1, %s18
      %p236 = scmp.lt.s32.totalorder %s18, 9
      %p237 = pnand %p235, %p236
      %p238 = pneg %p237
      // Predicated region
      $region29: #{pallas_linear.1} parent=5 // pred_check
        _
      $region30: #{pallas_linear.1} parent=5 // pred_check_branch
        %240 = sbr.rel (%p237) target = $region32
      $region31: #{pallas_linear.1} parent=5 // pred_region
        %s241 = ssub.s32 %s18, 1
        %s242 = sand.u32 %s52, 1
        %s243 = scalar_lea.sflag [#allocation4], %s242
        %s244 = sand.u32 %s52, 1
        %s245 = smul.addr %s244, 256
        %s246 = scalar_lea.vmem [#allocation3], %s245
        // Predicated region
        $region33: #{pallas_linear.1} parent=31 // pred_check
          %p247 = pneg %p65
        $region34: #{pallas_linear.1} parent=31 // pred_check_branch
          %249 = sbr.rel (%p247) target = $region36
        $region35: #{pallas_linear.1} parent=31 // pred_region
          %251 = dma.done %s243, 4096
        $region36: #{pallas_linear.1} parent=31 // pred_fallthru
          _
        %s252 = sand.u32 %s23, 1
        %s253 = scalar_lea.sflag [#allocation7], %s252
        %s254 = sand.u32 %s80, 1
        %s255 = smul.addr %s254, 512
        %s256 = scalar_lea.vmem [#allocation6], %s255
        // Predicated region
        $region37: #{pallas_linear.1} parent=31 // pred_check
          %p257 = pneg %p93
        $region38: #{pallas_linear.1} parent=31 // pred_check_branch
          %259 = sbr.rel (%p257) target = $region40
        $region39: #{pallas_linear.1} parent=31 // pred_region
          %261 = dma.done %s253, 8192
        $region40: #{pallas_linear.1} parent=31 // pred_fallthru
          _
        %s262 = sand.u32 %s23, 1
        %s263 = scalar_lea.sflag [#allocation7], %s262
        %s264 = sand.u32 %s106, 1
        %s265 = smul.addr %s264, 2
        %s266 = scalar_lea.vmem [#allocation8], %s265
        // Predicated region
        $region41: #{pallas_linear.1} parent=31 // pred_check
          %p267 = pneg %p119
        $region42: #{pallas_linear.1} parent=31 // pred_check_branch
          %269 = sbr.rel (%p267) target = $region44
        $region43: #{pallas_linear.1} parent=31 // pred_region
          %271 = dma.done %s263, 32
        $region44: #{pallas_linear.1} parent=31 // pred_fallthru
          _
        %s272 = sand.u32 %s52, 1
        %s273 = scalar_lea.sflag [#allocation4], %s272
        %s274 = sand.u32 %s52, 1
        %s275 = smul.addr %s274, 256
        %s276 = scalar_lea.vmem [#allocation3], %s275
        %p277 = pneg %p65
        %p278 = pneg %p62
        %s279 = sand.u32 %s23, 1
        %s280 = scalar_lea.sflag [#allocation7], %s279
        %s281 = sand.u32 %s80, 1
        %s282 = smul.addr %s281, 512
        %s283 = scalar_lea.vmem [#allocation6], %s282
        %p284 = pneg %p93
        %p285 = pneg %p90
        %s286 = sand.u32 %s23, 1
        %s287 = scalar_lea.sflag [#allocation7], %s286
        %s288 = sand.u32 %s106, 1
        %s289 = smul.addr %s288, 2
        %s290 = scalar_lea.vmem [#allocation8], %s289
        %p291 = pneg %p119
        %p292 = pneg %p116
        %p293 = pneg %p147
        %p294 = pneg %p144
        %s295 = sand.u32 %s134, 1
        %s296 = scalar_lea.sflag [#allocation5], %s295
        %s297 = sand.u32 %s134, 1
        %s298 = smul.addr %s297, 256
        %s299 = scalar_lea.vmem [#allocation9], %s298
        %s300 = smul.u32 16, %s28
        %s301 = smul.u32 2, %s30
        %s302 = smul.u32 32, %s30
        %s303 = smul.u32 2, %s29
        %s304 = smul.u32 2, %s29
        %s305 = smul.u32 16, %s28
        %s306 = smul.u32 2, %s29
        %p307 = scmp.eq.s32.totalorder %s30, 0
        // Predicated region
        $region45: #{pallas_linear.1} parent=31 // pred_check
          %p308 = pneg %p307
        $region46: #{pallas_linear.1} parent=31 // pred_check_branch
          %310 = sbr.rel (%p308) target = $region48
        $region47: #{pallas_linear.1} parent=31 // pred_region
          %311 = vst [vmem:[#allocation2] sm:$0xff] 0.0
          %312 = vst [vmem:[#allocation2 + $0x8] sm:$0xff] 0.0
          %313 = vst [vmem:[#allocation2 + $0x10] sm:$0xff] 0.0
          %314 = vst [vmem:[#allocation2 + $0x18] sm:$0xff] 0.0
          %315 = vst [vmem:[#allocation2 + $0x20] sm:$0xff] 0.0
          %316 = vst [vmem:[#allocation2 + $0x28] sm:$0xff] 0.0
          %317 = vst [vmem:[#allocation2 + $0x30] sm:$0xff] 0.0
          %318 = vst [vmem:[#allocation2 + $0x38] sm:$0xff] 0.0
          %319 = vst [vmem:[#allocation2 + $0x40] sm:$0xff] 0.0
          %320 = vst [vmem:[#allocation2 + $0x48] sm:$0xff] 0.0
          %321 = vst [vmem:[#allocation2 + $0x50] sm:$0xff] 0.0
          %322 = vst [vmem:[#allocation2 + $0x58] sm:$0xff] 0.0
          %323 = vst [vmem:[#allocation2 + $0x60] sm:$0xff] 0.0
          %324 = vst [vmem:[#allocation2 + $0x68] sm:$0xff] 0.0
          %325 = vst [vmem:[#allocation2 + $0x70] sm:$0xff] 0.0
          %326 = vst [vmem:[#allocation2 + $0x78] sm:$0xff] 0.0
          %327 = vst [vmem:[#allocation2 + $0x80] sm:$0xff] 0.0
          %328 = vst [vmem:[#allocation2 + $0x88] sm:$0xff] 0.0
          %329 = vst [vmem:[#allocation2 + $0x90] sm:$0xff] 0.0
          %330 = vst [vmem:[#allocation2 + $0x98] sm:$0xff] 0.0
          %331 = vst [vmem:[#allocation2 + $0xa0] sm:$0xff] 0.0
          %332 = vst [vmem:[#allocation2 + $0xa8] sm:$0xff] 0.0
          %333 = vst [vmem:[#allocation2 + $0xb0] sm:$0xff] 0.0
          %334 = vst [vmem:[#allocation2 + $0xb8] sm:$0xff] 0.0
          %335 = vst [vmem:[#allocation2 + $0xc0] sm:$0xff] 0.0
          %336 = vst [vmem:[#allocation2 + $0xc8] sm:$0xff] 0.0
          %337 = vst [vmem:[#allocation2 + $0xd0] sm:$0xff] 0.0
          %338 = vst [vmem:[#allocation2 + $0xd8] sm:$0xff] 0.0
          %339 = vst [vmem:[#allocation2 + $0xe0] sm:$0xff] 0.0
          %340 = vst [vmem:[#allocation2 + $0xe8] sm:$0xff] 0.0
          %341 = vst [vmem:[#allocation2 + $0xf0] sm:$0xff] 0.0
          %342 = vst [vmem:[#allocation2 + $0xf8] sm:$0xff] 0.0
        $region48: #{pallas_linear.1} parent=31 // pred_fallthru
          _
        %v343 = vld [vmem:[#allocation2] sm:$0xff]
        %v344 = vld [vmem:[#allocation2 + $0x8] sm:$0xff]
        %v345 = vld [vmem:[#allocation2 + $0x10] sm:$0xff]
        %v346 = vld [vmem:[#allocation2 + $0x18] sm:$0xff]
        %v347 = vld [vmem:[#allocation2 + $0x20] sm:$0xff]
        %v348 = vld [vmem:[#allocation2 + $0x28] sm:$0xff]
        %v349 = vld [vmem:[#allocation2 + $0x30] sm:$0xff]
        %v350 = vld [vmem:[#allocation2 + $0x38] sm:$0xff]
        %v351 = vld [vmem:[#allocation2 + $0x40] sm:$0xff]
        %v352 = vld [vmem:[#allocation2 + $0x48] sm:$0xff]
        %v353 = vld [vmem:[#allocation2 + $0x50] sm:$0xff]
        %v354 = vld [vmem:[#allocation2 + $0x58] sm:$0xff]
        %v355 = vld [vmem:[#allocation2 + $0x60] sm:$0xff]
        %v356 = vld [vmem:[#allocation2 + $0x68] sm:$0xff]
        %v357 = vld [vmem:[#allocation2 + $0x70] sm:$0xff]
        %v358 = vld [vmem:[#allocation2 + $0x78] sm:$0xff]
        %v359 = vld [vmem:[#allocation2 + $0x80] sm:$0xff]
        %v360 = vld [vmem:[#allocation2 + $0x88] sm:$0xff]
        %v361 = vld [vmem:[#allocation2 + $0x90] sm:$0xff]
        %v362 = vld [vmem:[#allocation2 + $0x98] sm:$0xff]
        %v363 = vld [vmem:[#allocation2 + $0xa0] sm:$0xff]
        %v364 = vld [vmem:[#allocation2 + $0xa8] sm:$0xff]
        %v365 = vld [vmem:[#allocation2 + $0xb0] sm:$0xff]
        %v366 = vld [vmem:[#allocation2 + $0xb8] sm:$0xff]
        %v367 = vld [vmem:[#allocation2 + $0xc0] sm:$0xff]
        %v368 = vld [vmem:[#allocation2 + $0xc8] sm:$0xff]
        %v369 = vld [vmem:[#allocation2 + $0xd0] sm:$0xff]
        %v370 = vld [vmem:[#allocation2 + $0xd8] sm:$0xff]
        %v371 = vld [vmem:[#allocation2 + $0xe0] sm:$0xff]
        %v372 = vld [vmem:[#allocation2 + $0xe8] sm:$0xff]
        %v373 = vld [vmem:[#allocation2 + $0xf0] sm:$0xff]
        %v374 = vld [vmem:[#allocation2 + $0xf8] sm:$0xff]
        %v375 = vld [vmem:[%s246] sm:$0xff]
        %v376 = vld [vmem:[%s246 + $0x8] sm:$0xff]
        %v377 = vld [vmem:[%s246 + $0x10] sm:$0xff]
        %v378 = vld [vmem:[%s246 + $0x18] sm:$0xff]
        %v379 = vld [vmem:[%s246 + $0x20] sm:$0xff]
        %v380 = vld [vmem:[%s246 + $0x28] sm:$0xff]
        %v381 = vld [vmem:[%s246 + $0x30] sm:$0xff]
        %v382 = vld [vmem:[%s246 + $0x38] sm:$0xff]
        %v383 = vld [vmem:[%s246 + $0x40] sm:$0xff]
        %v384 = vld [vmem:[%s246 + $0x48] sm:$0xff]
        %v385 = vld [vmem:[%s246 + $0x50] sm:$0xff]
        %v386 = vld [vmem:[%s246 + $0x58] sm:$0xff]
        %v387 = vld [vmem:[%s246 + $0x60] sm:$0xff]
        %v388 = vld [vmem:[%s246 + $0x68] sm:$0xff]
        %v389 = vld [vmem:[%s246 + $0x70] sm:$0xff]
        %v390 = vld [vmem:[%s246 + $0x78] sm:$0xff]
        %v391 = vld [vmem:[%s246 + $0x80] sm:$0xff]
        %v392 = vld [vmem:[%s246 + $0x88] sm:$0xff]
        %v393 = vld [vmem:[%s246 + $0x90] sm:$0xff]
        %v394 = vld [vmem:[%s246 + $0x98] sm:$0xff]
        %v395 = vld [vmem:[%s246 + $0xa0] sm:$0xff]
        %v396 = vld [vmem:[%s246 + $0xa8] sm:$0xff]
        %v397 = vld [vmem:[%s246 + $0xb0] sm:$0xff]
        %v398 = vld [vmem:[%s246 + $0xb8] sm:$0xff]
        %v399 = vld [vmem:[%s246 + $0xc0] sm:$0xff]
        %v400 = vld [vmem:[%s246 + $0xc8] sm:$0xff]
        %v401 = vld [vmem:[%s246 + $0xd0] sm:$0xff]
        %v402 = vld [vmem:[%s246 + $0xd8] sm:$0xff]
        %v403 = vld [vmem:[%s246 + $0xe0] sm:$0xff]
        %v404 = vld [vmem:[%s246 + $0xe8] sm:$0xff]
        %v405 = vld [vmem:[%s246 + $0xf0] sm:$0xff]
        %v406 = vld [vmem:[%s246 + $0xf8] sm:$0xff]
        %v407 = vld [vmem:[%s256] sm:$0xff]
        %v408 = vld [vmem:[%s256 + $0x8] sm:$0xff]
        %v409 = vld [vmem:[%s256 + $0x10] sm:$0xff]
        %v410 = vld [vmem:[%s256 + $0x18] sm:$0xff]
        %v411 = vld [vmem:[%s256 + $0x20] sm:$0xff]
        %v412 = vld [vmem:[%s256 + $0x28] sm:$0xff]
        %v413 = vld [vmem:[%s256 + $0x30] sm:$0xff]
        %v414 = vld [vmem:[%s256 + $0x38] sm:$0xff]
        %v415 = vld [vmem:[%s256 + $0x40] sm:$0xff]
        %v416 = vld [vmem:[%s256 + $0x48] sm:$0xff]
        %v417 = vld [vmem:[%s256 + $0x50] sm:$0xff]
        %v418 = vld [vmem:[%s256 + $0x58] sm:$0xff]
        %v419 = vld [vmem:[%s256 + $0x60] sm:$0xff]
        %v420 = vld [vmem:[%s256 + $0x68] sm:$0xff]
        %v421 = vld [vmem:[%s256 + $0x70] sm:$0xff]
        %v422 = vld [vmem:[%s256 + $0x78] sm:$0xff]
        %v423 = vld [vmem:[%s256 + $0x80] sm:$0xff]
        %v424 = vld [vmem:[%s256 + $0x88] sm:$0xff]
        %v425 = vld [vmem:[%s256 + $0x90] sm:$0xff]
        %v426 = vld [vmem:[%s256 + $0x98] sm:$0xff]
        %v427 = vld [vmem:[%s256 + $0xa0] sm:$0xff]
        %v428 = vld [vmem:[%s256 + $0xa8] sm:$0xff]
        %v429 = vld [vmem:[%s256 + $0xb0] sm:$0xff]
        %v430 = vld [vmem:[%s256 + $0xb8] sm:$0xff]
        %v431 = vld [vmem:[%s256 + $0xc0] sm:$0xff]
        %v432 = vld [vmem:[%s256 + $0xc8] sm:$0xff]
        %v433 = vld [vmem:[%s256 + $0xd0] sm:$0xff]
        %v434 = vld [vmem:[%s256 + $0xd8] sm:$0xff]
        %v435 = vld [vmem:[%s256 + $0xe0] sm:$0xff]
        %v436 = vld [vmem:[%s256 + $0xe8] sm:$0xff]
        %v437 = vld [vmem:[%s256 + $0xf0] sm:$0xff]
        %v438 = vld [vmem:[%s256 + $0xf8] sm:$0xff]
        %v439 = vld [vmem:[%s256 + $0x100] sm:$0xff]
        %v440 = vld [vmem:[%s256 + $0x108] sm:$0xff]
        %v441 = vld [vmem:[%s256 + $0x110] sm:$0xff]
        %v442 = vld [vmem:[%s256 + $0x118] sm:$0xff]
        %v443 = vld [vmem:[%s256 + $0x120] sm:$0xff]
        %v444 = vld [vmem:[%s256 + $0x128] sm:$0xff]
        %v445 = vld [vmem:[%s256 + $0x130] sm:$0xff]
        %v446 = vld [vmem:[%s256 + $0x138] sm:$0xff]
        %v447 = vld [vmem:[%s256 + $0x140] sm:$0xff]
        %v448 = vld [vmem:[%s256 + $0x148] sm:$0xff]
        %v449 = vld [vmem:[%s256 + $0x150] sm:$0xff]
        %v450 = vld [vmem:[%s256 + $0x158] sm:$0xff]
        %v451 = vld [vmem:[%s256 + $0x160] sm:$0xff]
        %v452 = vld [vmem:[%s256 + $0x168] sm:$0xff]
        %v453 = vld [vmem:[%s256 + $0x170] sm:$0xff]
        %v454 = vld [vmem:[%s256 + $0x178] sm:$0xff]
        %v455 = vld [vmem:[%s256 + $0x180] sm:$0xff]
        %v456 = vld [vmem:[%s256 + $0x188] sm:$0xff]
        %v457 = vld [vmem:[%s256 + $0x190] sm:$0xff]
        %v458 = vld [vmem:[%s256 + $0x198] sm:$0xff]
        %v459 = vld [vmem:[%s256 + $0x1a0] sm:$0xff]
        %v460 = vld [vmem:[%s256 + $0x1a8] sm:$0xff]
        %v461 = vld [vmem:[%s256 + $0x1b0] sm:$0xff]
        %v462 = vld [vmem:[%s256 + $0x1b8] sm:$0xff]
        %v463 = vld [vmem:[%s256 + $0x1c0] sm:$0xff]
        %v464 = vld [vmem:[%s256 + $0x1c8] sm:$0xff]
        %v465 = vld [vmem:[%s256 + $0x1d0] sm:$0xff]
        %v466 = vld [vmem:[%s256 + $0x1d8] sm:$0xff]
        %v467 = vld [vmem:[%s256 + $0x1e0] sm:$0xff]
        %v468 = vld [vmem:[%s256 + $0x1e8] sm:$0xff]
        %v469 = vld [vmem:[%s256 + $0x1f0] sm:$0xff]
        %v470 = vld [vmem:[%s256 + $0x1f8] sm:$0xff]
        %471 = vmatpush.msra.mxu0 %v437
        %472 = vmatpush.msra.mxu0 %v435
        %473 = vmatpush.msra.mxu0 %v433
        %474 = vmatpush.msra.mxu0 %v431
        %475 = vmatpush.msra.mxu0 %v429
        %476 = vmatpush.msra.mxu0 %v427
        %477 = vmatpush.msra.mxu0 %v425
        %478 = vmatpush.msra.mxu0 %v423
        %479 = vmatpush.msra.mxu0 %v421
        %480 = vmatpush.msra.mxu0 %v419
        %481 = vmatpush.msra.mxu0 %v417
        %482 = vmatpush.msra.mxu0 %v415
        %483 = vmatpush.msra.mxu0 %v413
        %484 = vmatpush.msra.mxu0 %v411
        %485 = vmatpush.msra.mxu0 %v409
        %486 = vmatpush.msra.mxu0 %v407
        %487 = vmatmul.f32.gmra.mxu0 %v375
        %v488 = vpop.f32.mrf.mxu0
        %v489 = vadd.f32 0.0, %v488
        %490 = vmatmul.f32.gmra.mxu0 %v377
        %v491 = vpop.f32.mrf.mxu0
        %v492 = vadd.f32 0.0, %v491
        %493 = vmatmul.f32.gmra.mxu0 %v379
        %v494 = vpop.f32.mrf.mxu0
        %v495 = vadd.f32 0.0, %v494
        %496 = vmatmul.f32.gmra.mxu0 %v381
        %v497 = vpop.f32.mrf.mxu0
        %v498 = vadd.f32 0.0, %v497
        %499 = vmatmul.f32.gmra.mxu0 %v383
        %v500 = vpop.f32.mrf.mxu0
        %v501 = vadd.f32 0.0, %v500
        %502 = vmatmul.f32.gmra.mxu0 %v385
        %v503 = vpop.f32.mrf.mxu0
        %v504 = vadd.f32 0.0, %v503
        %505 = vmatmul.f32.gmra.mxu0 %v387
        %v506 = vpop.f32.mrf.mxu0
        %v507 = vadd.f32 0.0, %v506
        %508 = vmatmul.f32.gmra.mxu0 %v389
        %v509 = vpop.f32.mrf.mxu0
        %v510 = vadd.f32 0.0, %v509
        %511 = vmatmul.f32.gmra.mxu0 %v391
        %v512 = vpop.f32.mrf.mxu0
        %v513 = vadd.f32 0.0, %v512
        %514 = vmatmul.f32.gmra.mxu0 %v393
        %v515 = vpop.f32.mrf.mxu0
        %v516 = vadd.f32 0.0, %v515
        %517 = vmatmul.f32.gmra.mxu0 %v395
        %v518 = vpop.f32.mrf.mxu0
        %v519 = vadd.f32 0.0, %v518
        %520 = vmatmul.f32.gmra.mxu0 %v397
        %v521 = vpop.f32.mrf.mxu0
        %v522 = vadd.f32 0.0, %v521
        %523 = vmatmul.f32.gmra.mxu0 %v399
        %v524 = vpop.f32.mrf.mxu0
        %v525 = vadd.f32 0.0, %v524
        %526 = vmatmul.f32.gmra.mxu0 %v401
        %v527 = vpop.f32.mrf.mxu0
        %v528 = vadd.f32 0.0, %v527
        %529 = vmatmul.f32.gmra.mxu0 %v403
        %v530 = vpop.f32.mrf.mxu0
        %v531 = vadd.f32 0.0, %v530
        %532 = vmatmul.f32.gmra.mxu0 %v405
        %v533 = vpop.f32.mrf.mxu0
        %v534 = vadd.f32 0.0, %v533
        %535 = vdwg.mxu0
        %536 = vmatpush.msra.mxu0 %v469
        %537 = vmatpush.msra.mxu0 %v467
        %538 = vmatpush.msra.mxu0 %v465
        %539 = vmatpush.msra.mxu0 %v463
        %540 = vmatpush.msra.mxu0 %v461
        %541 = vmatpush.msra.mxu0 %v459
        %542 = vmatpush.msra.mxu0 %v457
        %543 = vmatpush.msra.mxu0 %v455
        %544 = vmatpush.msra.mxu0 %v453
        %545 = vmatpush.msra.mxu0 %v451
        %546 = vmatpush.msra.mxu0 %v449
        %547 = vmatpush.msra.mxu0 %v447
        %548 = vmatpush.msra.mxu0 %v445
        %549 = vmatpush.msra.mxu0 %v443
        %550 = vmatpush.msra.mxu0 %v441
        %551 = vmatpush.msra.mxu0 %v439
        %552 = vmatmul.f32.gmra.mxu0 %v376
        %v553 = vpop.f32.mrf.mxu0
        %v554 = vadd.f32 %v489, %v553
        %555 = vmatmul.f32.gmra.mxu0 %v378
        %v556 = vpop.f32.mrf.mxu0
        %v557 = vadd.f32 %v492, %v556
        %558 = vmatmul.f32.gmra.mxu0 %v380
        %v559 = vpop.f32.mrf.mxu0
        %v560 = vadd.f32 %v495, %v559
        %561 = vmatmul.f32.gmra.mxu0 %v382
        %v562 = vpop.f32.mrf.mxu0
        %v563 = vadd.f32 %v498, %v562
        %564 = vmatmul.f32.gmra.mxu0 %v384
        %v565 = vpop.f32.mrf.mxu0
        %v566 = vadd.f32 %v501, %v565
        %567 = vmatmul.f32.gmra.mxu0 %v386
        %v568 = vpop.f32.mrf.mxu0
        %v569 = vadd.f32 %v504, %v568
        %570 = vmatmul.f32.gmra.mxu0 %v388
        %v571 = vpop.f32.mrf.mxu0
        %v572 = vadd.f32 %v507, %v571
        %573 = vmatmul.f32.gmra.mxu0 %v390
        %v574 = vpop.f32.mrf.mxu0
        %v575 = vadd.f32 %v510, %v574
        %576 = vmatmul.f32.gmra.mxu0 %v392
        %v577 = vpop.f32.mrf.mxu0
        %v578 = vadd.f32 %v513, %v577
        %579 = vmatmul.f32.gmra.mxu0 %v394
        %v580 = vpop.f32.mrf.mxu0
        %v581 = vadd.f32 %v516, %v580
        %582 = vmatmul.f32.gmra.mxu0 %v396
        %v583 = vpop.f32.mrf.mxu0
        %v584 = vadd.f32 %v519, %v583
        %585 = vmatmul.f32.gmra.mxu0 %v398
        %v586 = vpop.f32.mrf.mxu0
        %v587 = vadd.f32 %v522, %v586
        %588 = vmatmul.f32.gmra.mxu0 %v400
        %v589 = vpop.f32.mrf.mxu0
        %v590 = vadd.f32 %v525, %v589
        %591 = vmatmul.f32.gmra.mxu0 %v402
        %v592 = vpop.f32.mrf.mxu0
        %v593 = vadd.f32 %v528, %v592
        %594 = vmatmul.f32.gmra.mxu0 %v404
        %v595 = vpop.f32.mrf.mxu0
        %v596 = vadd.f32 %v531, %v595
        %597 = vmatmul.f32.gmra.mxu0 %v406
        %v598 = vpop.f32.mrf.mxu0
        %v599 = vadd.f32 %v534, %v598
        %600 = vdwg.mxu0
        %601 = vmatpush.msra.mxu0 %v438
        %602 = vmatpush.msra.mxu0 %v436
        %603 = vmatpush.msra.mxu0 %v434
        %604 = vmatpush.msra.mxu0 %v432
        %605 = vmatpush.msra.mxu0 %v430
        %606 = vmatpush.msra.mxu0 %v428
        %607 = vmatpush.msra.mxu0 %v426
        %608 = vmatpush.msra.mxu0 %v424
        %609 = vmatpush.msra.mxu0 %v422
        %610 = vmatpush.msra.mxu0 %v420
        %611 = vmatpush.msra.mxu0 %v418
        %612 = vmatpush.msra.mxu0 %v416
        %613 = vmatpush.msra.mxu0 %v414
        %614 = vmatpush.msra.mxu0 %v412
        %615 = vmatpush.msra.mxu0 %v410
        %616 = vmatpush.msra.mxu0 %v408
        %617 = vmatmul.f32.gmra.mxu0 %v375
        %v618 = vpop.f32.mrf.mxu0
        %v619 = vadd.f32 0.0, %v618
        %620 = vmatmul.f32.gmra.mxu0 %v377
        %v621 = vpop.f32.mrf.mxu0
        %v622 = vadd.f32 0.0, %v621
        %623 = vmatmul.f32.gmra.mxu0 %v379
        %v624 = vpop.f32.mrf.mxu0
        %v625 = vadd.f32 0.0, %v624
        %626 = vmatmul.f32.gmra.mxu0 %v381
        %v627 = vpop.f32.mrf.mxu0
        %v628 = vadd.f32 0.0, %v627
        %629 = vmatmul.f32.gmra.mxu0 %v383
        %v630 = vpop.f32.mrf.mxu0
        %v631 = vadd.f32 0.0, %v630
        %632 = vmatmul.f32.gmra.mxu0 %v385
        %v633 = vpop.f32.mrf.mxu0
        %v634 = vadd.f32 0.0, %v633
        %635 = vmatmul.f32.gmra.mxu0 %v387
        %v636 = vpop.f32.mrf.mxu0
        %v637 = vadd.f32 0.0, %v636
        %638 = vmatmul.f32.gmra.mxu0 %v389
        %v639 = vpop.f32.mrf.mxu0
        %v640 = vadd.f32 0.0, %v639
        %641 = vmatmul.f32.gmra.mxu0 %v391
        %v642 = vpop.f32.mrf.mxu0
        %v643 = vadd.f32 0.0, %v642
        %644 = vmatmul.f32.gmra.mxu0 %v393
        %v645 = vpop.f32.mrf.mxu0
        %v646 = vadd.f32 0.0, %v645
        %647 = vmatmul.f32.gmra.mxu0 %v395
        %v648 = vpop.f32.mrf.mxu0
        %v649 = vadd.f32 0.0, %v648
        %650 = vmatmul.f32.gmra.mxu0 %v397
        %v651 = vpop.f32.mrf.mxu0
        %v652 = vadd.f32 0.0, %v651
        %653 = vmatmul.f32.gmra.mxu0 %v399
        %v654 = vpop.f32.mrf.mxu0
        %v655 = vadd.f32 0.0, %v654
        %656 = vmatmul.f32.gmra.mxu0 %v401
        %v657 = vpop.f32.mrf.mxu0
        %v658 = vadd.f32 0.0, %v657
        %659 = vmatmul.f32.gmra.mxu0 %v403
        %v660 = vpop.f32.mrf.mxu0
        %v661 = vadd.f32 0.0, %v660
        %662 = vmatmul.f32.gmra.mxu0 %v405
        %v663 = vpop.f32.mrf.mxu0
        %v664 = vadd.f32 0.0, %v663
        %665 = vdwg.mxu0
        %666 = vmatpush.msra.mxu0 %v470
        %667 = vmatpush.msra.mxu0 %v468
        %668 = vmatpush.msra.mxu0 %v466
        %669 = vmatpush.msra.mxu0 %v464
        %670 = vmatpush.msra.mxu0 %v462
        %671 = vmatpush.msra.mxu0 %v460
        %672 = vmatpush.msra.mxu0 %v458
        %673 = vmatpush.msra.mxu0 %v456
        %674 = vmatpush.msra.mxu0 %v454
        %675 = vmatpush.msra.mxu0 %v452
        %676 = vmatpush.msra.mxu0 %v450
        %677 = vmatpush.msra.mxu0 %v448
        %678 = vmatpush.msra.mxu0 %v446
        %679 = vmatpush.msra.mxu0 %v444
        %680 = vmatpush.msra.mxu0 %v442
        %681 = vmatpush.msra.mxu0 %v440
        %682 = vmatmul.f32.gmra.mxu0 %v376
        %v683 = vpop.f32.mrf.mxu0
        %v684 = vadd.f32 %v619, %v683
        %685 = vmatmul.f32.gmra.mxu0 %v378
        %v686 = vpop.f32.mrf.mxu0
        %v687 = vadd.f32 %v622, %v686
        %688 = vmatmul.f32.gmra.mxu0 %v380
        %v689 = vpop.f32.mrf.mxu0
        %v690 = vadd.f32 %v625, %v689
        %691 = vmatmul.f32.gmra.mxu0 %v382
        %v692 = vpop.f32.mrf.mxu0
        %v693 = vadd.f32 %v628, %v692
        %694 = vmatmul.f32.gmra.mxu0 %v384
        %v695 = vpop.f32.mrf.mxu0
        %v696 = vadd.f32 %v631, %v695
        %697 = vmatmul.f32.gmra.mxu0 %v386
        %v698 = vpop.f32.mrf.mxu0
        %v699 = vadd.f32 %v634, %v698
        %700 = vmatmul.f32.gmra.mxu0 %v388
        %v701 = vpop.f32.mrf.mxu0
        %v702 = vadd.f32 %v637, %v701
        %703 = vmatmul.f32.gmra.mxu0 %v390
        %v704 = vpop.f32.mrf.mxu0
        %v705 = vadd.f32 %v640, %v704
        %706 = vmatmul.f32.gmra.mxu0 %v392
        %v707 = vpop.f32.mrf.mxu0
        %v708 = vadd.f32 %v643, %v707
        %709 = vmatmul.f32.gmra.mxu0 %v394
        %v710 = vpop.f32.mrf.mxu0
        %v711 = vadd.f32 %v646, %v710
        %712 = vmatmul.f32.gmra.mxu0 %v396
        %v713 = vpop.f32.mrf.mxu0
        %v714 = vadd.f32 %v649, %v713
        %715 = vmatmul.f32.gmra.mxu0 %v398
        %v716 = vpop.f32.mrf.mxu0
        %v717 = vadd.f32 %v652, %v716
        %718 = vmatmul.f32.gmra.mxu0 %v400
        %v719 = vpop.f32.mrf.mxu0
        %v720 = vadd.f32 %v655, %v719
        %721 = vmatmul.f32.gmra.mxu0 %v402
        %v722 = vpop.f32.mrf.mxu0
        %v723 = vadd.f32 %v658, %v722
        %724 = vmatmul.f32.gmra.mxu0 %v404
        %v725 = vpop.f32.mrf.mxu0
        %v726 = vadd.f32 %v661, %v725
        %727 = vmatmul.f32.gmra.mxu0 %v406
        %v728 = vpop.f32.mrf.mxu0
        %v729 = vadd.f32 %v664, %v728
        %730 = vdwg.mxu0
        %v731 = vadd.f32 %v343, %v554
        %v732 = vadd.f32 %v344, %v684
        %v733 = vadd.f32 %v345, %v557
        %v734 = vadd.f32 %v346, %v687
        %v735 = vadd.f32 %v347, %v560
        %v736 = vadd.f32 %v348, %v690
        %v737 = vadd.f32 %v349, %v563
        %v738 = vadd.f32 %v350, %v693
        %v739 = vadd.f32 %v351, %v566
        %v740 = vadd.f32 %v352, %v696
        %v741 = vadd.f32 %v353, %v569
        %v742 = vadd.f32 %v354, %v699
        %v743 = vadd.f32 %v355, %v572
        %v744 = vadd.f32 %v356, %v702
        %v745 = vadd.f32 %v357, %v575
        %v746 = vadd.f32 %v358, %v705
        %v747 = vadd.f32 %v359, %v578
        %v748 = vadd.f32 %v360, %v708
        %v749 = vadd.f32 %v361, %v581
        %v750 = vadd.f32 %v362, %v711
        %v751 = vadd.f32 %v363, %v584
        %v752 = vadd.f32 %v364, %v714
        %v753 = vadd.f32 %v365, %v587
        %v754 = vadd.f32 %v366, %v717
        %v755 = vadd.f32 %v367, %v590
        %v756 = vadd.f32 %v368, %v720
        %v757 = vadd.f32 %v369, %v593
        %v758 = vadd.f32 %v370, %v723
        %v759 = vadd.f32 %v371, %v596
        %v760 = vadd.f32 %v372, %v726
        %v761 = vadd.f32 %v373, %v599
        %v762 = vadd.f32 %v374, %v729
        %763 = vst [vmem:[#allocation2] sm:$0xff] %v731
        %764 = vst [vmem:[#allocation2 + $0x8] sm:$0xff] %v732
        %765 = vst [vmem:[#allocation2 + $0x10] sm:$0xff] %v733
        %766 = vst [vmem:[#allocation2 + $0x18] sm:$0xff] %v734
        %767 = vst [vmem:[#allocation2 + $0x20] sm:$0xff] %v735
        %768 = vst [vmem:[#allocation2 + $0x28] sm:$0xff] %v736
        %769 = vst [vmem:[#allocation2 + $0x30] sm:$0xff] %v737
        %770 = vst [vmem:[#allocation2 + $0x38] sm:$0xff] %v738
        %771 = vst [vmem:[#allocation2 + $0x40] sm:$0xff] %v739
        %772 = vst [vmem:[#allocation2 + $0x48] sm:$0xff] %v740
        %773 = vst [vmem:[#allocation2 + $0x50] sm:$0xff] %v741
        %774 = vst [vmem:[#allocation2 + $0x58] sm:$0xff] %v742
        %775 = vst [vmem:[#allocation2 + $0x60] sm:$0xff] %v743
        %776 = vst [vmem:[#allocation2 + $0x68] sm:$0xff] %v744
        %777 = vst [vmem:[#allocation2 + $0x70] sm:$0xff] %v745
        %778 = vst [vmem:[#allocation2 + $0x78] sm:$0xff] %v746
        %779 = vst [vmem:[#allocation2 + $0x80] sm:$0xff] %v747
        %780 = vst [vmem:[#allocation2 + $0x88] sm:$0xff] %v748
        %781 = vst [vmem:[#allocation2 + $0x90] sm:$0xff] %v749
        %782 = vst [vmem:[#allocation2 + $0x98] sm:$0xff] %v750
        %783 = vst [vmem:[#allocation2 + $0xa0] sm:$0xff] %v751
        %784 = vst [vmem:[#allocation2 + $0xa8] sm:$0xff] %v752
        %785 = vst [vmem:[#allocation2 + $0xb0] sm:$0xff] %v753
        %786 = vst [vmem:[#allocation2 + $0xb8] sm:$0xff] %v754
        %787 = vst [vmem:[#allocation2 + $0xc0] sm:$0xff] %v755
        %788 = vst [vmem:[#allocation2 + $0xc8] sm:$0xff] %v756
        %789 = vst [vmem:[#allocation2 + $0xd0] sm:$0xff] %v757
        %790 = vst [vmem:[#allocation2 + $0xd8] sm:$0xff] %v758
        %791 = vst [vmem:[#allocation2 + $0xe0] sm:$0xff] %v759
        %792 = vst [vmem:[#allocation2 + $0xe8] sm:$0xff] %v760
        %793 = vst [vmem:[#allocation2 + $0xf0] sm:$0xff] %v761
        %794 = vst [vmem:[#allocation2 + $0xf8] sm:$0xff] %v762
        %p795 = scmp.eq.s32.totalorder %s30, 1
        // Predicated region
        $region49: #{pallas_linear.1} parent=31 // pred_check
          %p796 = pneg %p795
        $region50: #{pallas_linear.1} parent=31 // pred_check_branch
          %798 = sbr.rel (%p796) target = $region52
        $region51: #{pallas_linear.1} parent=31 // pred_region
          %v799 = vld [vmem:[#allocation2] sm:$0xff]
          %v800 = vld [vmem:[#allocation2 + $0x8] sm:$0xff]
          %v801 = vld [vmem:[#allocation2 + $0x10] sm:$0xff]
          %v802 = vld [vmem:[#allocation2 + $0x18] sm:$0xff]
          %v803 = vld [vmem:[#allocation2 + $0x20] sm:$0xff]
          %v804 = vld [vmem:[#allocation2 + $0x28] sm:$0xff]
          %v805 = vld [vmem:[#allocation2 + $0x30] sm:$0xff]
          %v806 = vld [vmem:[#allocation2 + $0x38] sm:$0xff]
          %v807 = vld [vmem:[#allocation2 + $0x40] sm:$0xff]
          %v808 = vld [vmem:[#allocation2 + $0x48] sm:$0xff]
          %v809 = vld [vmem:[#allocation2 + $0x50] sm:$0xff]
          %v810 = vld [vmem:[#allocation2 + $0x58] sm:$0xff]
          %v811 = vld [vmem:[#allocation2 + $0x60] sm:$0xff]
          %v812 = vld [vmem:[#allocation2 + $0x68] sm:$0xff]
          %v813 = vld [vmem:[#allocation2 + $0x70] sm:$0xff]
          %v814 = vld [vmem:[#allocation2 + $0x78] sm:$0xff]
          %v815 = vld [vmem:[#allocation2 + $0x80] sm:$0xff]
          %v816 = vld [vmem:[#allocation2 + $0x88] sm:$0xff]
          %v817 = vld [vmem:[#allocation2 + $0x90] sm:$0xff]
          %v818 = vld [vmem:[#allocation2 + $0x98] sm:$0xff]
          %v819 = vld [vmem:[#allocation2 + $0xa0] sm:$0xff]
          %v820 = vld [vmem:[#allocation2 + $0xa8] sm:$0xff]
          %v821 = vld [vmem:[#allocation2 + $0xb0] sm:$0xff]
          %v822 = vld [vmem:[#allocation2 + $0xb8] sm:$0xff]
          %v823 = vld [vmem:[#allocation2 + $0xc0] sm:$0xff]
          %v824 = vld [vmem:[#allocation2 + $0xc8] sm:$0xff]
          %v825 = vld [vmem:[#allocation2 + $0xd0] sm:$0xff]
          %v826 = vld [vmem:[#allocation2 + $0xd8] sm:$0xff]
          %v827 = vld [vmem:[#allocation2 + $0xe0] sm:$0xff]
          %v828 = vld [vmem:[#allocation2 + $0xe8] sm:$0xff]
          %v829 = vld [vmem:[#allocation2 + $0xf0] sm:$0xff]
          %v830 = vld [vmem:[#allocation2 + $0xf8] sm:$0xff]
          %v831 = vld [vmem:[%s266] sm:$0x3]
          %v833 = vperm.slane %v831, 0
          %v834 = vperm.slane %v831, 1
          %v837 = vadd.f32 %v799, %v833
          %v838 = vadd.f32 %v800, %v834
          %v839 = vadd.f32 %v801, %v833
          %v840 = vadd.f32 %v802, %v834
          %v841 = vadd.f32 %v803, %v833
          %v842 = vadd.f32 %v804, %v834
          %v843 = vadd.f32 %v805, %v833
          %v844 = vadd.f32 %v806, %v834
          %v845 = vadd.f32 %v807, %v833
          %v846 = vadd.f32 %v808, %v834
          %v847 = vadd.f32 %v809, %v833
          %v848 = vadd.f32 %v810, %v834
          %v849 = vadd.f32 %v811, %v833
          %v850 = vadd.f32 %v812, %v834
          %v851 = vadd.f32 %v813, %v833
          %v852 = vadd.f32 %v814, %v834
          %v853 = vadd.f32 %v815, %v833
          %v854 = vadd.f32 %v816, %v834
          %v855 = vadd.f32 %v817, %v833
          %v856 = vadd.f32 %v818, %v834
          %v857 = vadd.f32 %v819, %v833
          %v858 = vadd.f32 %v820, %v834
          %v859 = vadd.f32 %v821, %v833
          %v860 = vadd.f32 %v822, %v834
          %v861 = vadd.f32 %v823, %v833
          %v862 = vadd.f32 %v824, %v834
          %v863 = vadd.f32 %v825, %v833
          %v864 = vadd.f32 %v826, %v834
          %v865 = vadd.f32 %v827, %v833
          %v866 = vadd.f32 %v828, %v834
          %v867 = vadd.f32 %v829, %v833
          %v868 = vadd.f32 %v830, %v834
          %869 = vst [vmem:[%s299] sm:$0xff] %v837
          %870 = vst [vmem:[%s299 + $0x8] sm:$0xff] %v838
          %871 = vst [vmem:[%s299 + $0x10] sm:$0xff] %v839
          %872 = vst [vmem:[%s299 + $0x18] sm:$0xff] %v840
          %873 = vst [vmem:[%s299 + $0x20] sm:$0xff] %v841
          %874 = vst [vmem:[%s299 + $0x28] sm:$0xff] %v842
          %875 = vst [vmem:[%s299 + $0x30] sm:$0xff] %v843
          %876 = vst [vmem:[%s299 + $0x38] sm:$0xff] %v844
          %877 = vst [vmem:[%s299 + $0x40] sm:$0xff] %v845
          %878 = vst [vmem:[%s299 + $0x48] sm:$0xff] %v846
          %879 = vst [vmem:[%s299 + $0x50] sm:$0xff] %v847
          %880 = vst [vmem:[%s299 + $0x58] sm:$0xff] %v848
          %881 = vst [vmem:[%s299 + $0x60] sm:$0xff] %v849
          %882 = vst [vmem:[%s299 + $0x68] sm:$0xff] %v850
          %883 = vst [vmem:[%s299 + $0x70] sm:$0xff] %v851
          %884 = vst [vmem:[%s299 + $0x78] sm:$0xff] %v852
          %885 = vst [vmem:[%s299 + $0x80] sm:$0xff] %v853
          %886 = vst [vmem:[%s299 + $0x88] sm:$0xff] %v854
          %887 = vst [vmem:[%s299 + $0x90] sm:$0xff] %v855
          %888 = vst [vmem:[%s299 + $0x98] sm:$0xff] %v856
          %889 = vst [vmem:[%s299 + $0xa0] sm:$0xff] %v857
          %890 = vst [vmem:[%s299 + $0xa8] sm:$0xff] %v858
          %891 = vst [vmem:[%s299 + $0xb0] sm:$0xff] %v859
          %892 = vst [vmem:[%s299 + $0xb8] sm:$0xff] %v860
          %893 = vst [vmem:[%s299 + $0xc0] sm:$0xff] %v861
          %894 = vst [vmem:[%s299 + $0xc8] sm:$0xff] %v862
          %895 = vst [vmem:[%s299 + $0xd0] sm:$0xff] %v863
          %896 = vst [vmem:[%s299 + $0xd8] sm:$0xff] %v864
          %897 = vst [vmem:[%s299 + $0xe0] sm:$0xff] %v865
          %898 = vst [vmem:[%s299 + $0xe8] sm:$0xff] %v866
          %899 = vst [vmem:[%s299 + $0xf0] sm:$0xff] %v867
          %900 = vst [vmem:[%s299 + $0xf8] sm:$0xff] %v868
        $region52: #{pallas_linear.1} parent=31 // pred_fallthru
          _
        %s901 = sand.u32 %s134, 1
        %s902 = scalar_lea.sflag [#allocation5], %s901
        %s903 = sand.u32 %s134, 1
        %s904 = smul.addr %s903, 256
        %s905 = scalar_lea.vmem [#allocation9], %s904
        // Predicated region
        $region53: #{pallas_linear.1} parent=31 // pred_check
          %p906 = pneg %p144
        $region54: #{pallas_linear.1} parent=31 // pred_check_branch
          %908 = sbr.rel (%p906) target = $region56
        $region55: #{pallas_linear.1} parent=31 // pred_region
          %s909 = smul.u32 16, %s28
          %s910 = smul.u32 2, %s29
          %912 = vsyncadd %s902, 0
          %s913 = smul.addr %s909, 4
          %s914 = sadd.s32 %s910, %s913
          %s915 = smul.addr %s914, 8
          %s916 = scalar_lea.hbm %s3, %s915
          %s917 = sshll.u32 %s905, 4
          %s918 = int_to_ptr.vmem [resolvable:$true] %s917
          %s919 = sshll.u32 %s916, 4
          %s920 = int_to_ptr.hbm [resolvable:$true] %s919
          %925 = dma.vmem_to_hbm [thread:$0]  %s918, 4096, %s920, %s902, 256, 512, 16
        $region56: #{pallas_linear.1} parent=31 // pred_fallthru
          _
      $region32: #{pallas_linear.1} parent=5 // pred_fallthru
        _
      %p926 = scmp.le.s32.totalorder 2, %s18
      // Predicated region
      $region57: #{pallas_linear.1} parent=5 // pred_check
        %p927 = pneg %p926
      $region58: #{pallas_linear.1} parent=5 // pred_check_branch
        %929 = sbr.rel (%p927) target = $region60
      $region59: #{pallas_linear.1} parent=5 // pred_region
        %s930 = ssub.s32 %s18, 2
        // Predicated region
        $region61: #{pallas_linear.1} parent=59 // pred_check
          %p931 = pneg %p150
        $region62: #{pallas_linear.1} parent=59 // pred_check_branch
          %933 = sbr.rel (%p931) target = $region64
        $region63: #{pallas_linear.1} parent=59 // pred_region
          %s934 = sand.u32 %s135, 1
          %s935 = scalar_lea.sflag [#allocation5], %s934
          %s936 = sand.u32 %s135, 1
          %s937 = smul.addr %s936, 256
          %s938 = scalar_lea.vmem [#allocation9], %s937
          %940 = dma.done %s935, 4096
        $region64: #{pallas_linear.1} parent=59 // pred_fallthru
          _
      $region60: #{pallas_linear.1} parent=5 // pred_fallthru
        _
    $region6: #{pallas_linear.1} parent=1 // loop_footer
      %s22 = sadd.s32 1, %s18
    $region7: #{pallas_linear.1} parent=1 // loop_footer_branch
      %17 = sbr.rel target = $region3
    $region8: #{pallas_linear.1} parent=1 // loop_exit
      _
    %941 = vsyncpa [#allocation4], 1
    %s942 = scalar_lea.sflag [#allocation4], 1
    %943 = vsyncpa %s942, 1
    %944 = vsyncpa [#allocation7], 1
    %s945 = scalar_lea.sflag [#allocation7], 1
    %946 = vsyncpa %s945, 1
    %947 = vsyncpa [#allocation5], 1
    %s948 = scalar_lea.sflag [#allocation5], 1
    %949 = vsyncpa %s948, 1

</llo_original>
